<compile_context>
chip_gen: v7x
topology: tpu7x:2x2x1
jax: 0.10.0
libtpu: 0.0.40
codegen_flags: <defaults>
</compile_context>

<pallas_src>
import jax
import jax.numpy as jnp
from jax.experimental import pallas as pl
from jax.experimental.pallas import tpu as pltpu


_LANES = 128                       # minimum lane-dense last dim
_SMALL_BYTES = 1 << 20             # <= 1 MiB: single full-array block, no grid
_TARGET_BLOCK_BYTES = 4 << 20      # ~4 MiB per block (in+out double-buffered = 16 MiB)
_VMEM_LIMIT_BYTES = 32 << 20       # explicit: v5e default scoped VMEM is only 16 MiB


# ----------------------------------------------------------------------------
# Kernel: elementwise SiLU on one VMEM tile.
# ----------------------------------------------------------------------------
def _silu_kernel(x_ref, o_ref):
    # f32 compute: required on v5e (no bf16 VPU/EUP); sigmoid goes to EUP.
    xf = x_ref[...].astype(jnp.float32)
    o_ref[...] = (xf * jax.lax.logistic(xf)).astype(o_ref.dtype)


# ----------------------------------------------------------------------------
# pallas_call wrappers
# ----------------------------------------------------------------------------
def _single_block_call(x2d):
    """Whole array as one VMEM block (tiny inputs / ragged tails)."""
    return pl.pallas_call(
        _silu_kernel,
        out_shape=jax.ShapeDtypeStruct(x2d.shape, x2d.dtype),
    )(x2d)


def _tiled_call(x2d, block_rows):
    """1-D grid over rows of a lane-dense (rows, lanes) slab."""
    rows, lanes = x2d.shape
    grid = pl.cdiv(rows, block_rows)  # partial last block is masked by Pallas
    return pl.pallas_call(
        _silu_kernel,
        out_shape=jax.ShapeDtypeStruct((rows, lanes), x2d.dtype),
        grid_spec=pltpu.PrefetchScalarGridSpec(
            num_scalar_prefetch=0,
            grid=(grid,),
            in_specs=[pl.BlockSpec((block_rows, lanes), lambda i: (i, 0))],
            out_specs=pl.BlockSpec((block_rows, lanes), lambda i: (i, 0)),
        ),
        compiler_params=pltpu.CompilerParams(
            dimension_semantics=("parallel",),
            vmem_limit_bytes=_VMEM_LIMIT_BYTES,
        ),
    )(x2d)


# ----------------------------------------------------------------------------
# Tiling heuristics
# ----------------------------------------------------------------------------
def _pick_lanes(n):
    """Largest lane-dense last dim (multiple of 128) that divides n."""
    for cand in (4096, 2048, 1024, 512, 256, 128):
        if n % cand == 0:
            return cand
    return None


def _pick_block_rows(rows, lanes, itemsize):
    """~_TARGET_BLOCK_BYTES rows per block, sublane-multiple, >=2 grid steps."""
    sub = max(8, 32 // itemsize)          # sublane packing: 8 f32 / 16 bf16 / 32 int8
    br = max(sub, (_TARGET_BLOCK_BYTES // (lanes * itemsize)) // sub * sub)
    half = (rows // 2) // sub * sub       # keep >= 2 grid steps (v7x has 2 TCs)
    if half >= sub:
        br = min(br, half)
    return min(br, rows)


# ----------------------------------------------------------------------------
# Lambda.forward equivalent (func = SiLU)
# ----------------------------------------------------------------------------
def lambda_forward(x):
    """JAX/Pallas equivalent of Lambda(func).forward(x) with func = SiLU."""
    orig_shape = x.shape
    n = x.size
    if n == 0:
        return x
    itemsize = jnp.dtype(x.dtype).itemsize
    flat = x.reshape(-1)

    # Tiny inputs: one full-array block, no grid, no padding.
    if n * itemsize <= _SMALL_BYTES:
        if n % _LANES == 0:
            x2d = flat.reshape(n // _LANES, _LANES)
        else:
            x2d = flat.reshape(1, n)
        return _single_block_call(x2d).reshape(orig_shape)

    # Large, 128-aligned inputs: lane-dense tiled streaming kernel.
    lanes = _pick_lanes(n)
    if lanes is not None:
        x2d = flat.reshape(n // lanes, lanes)
        br = _pick_block_rows(x2d.shape[0], lanes, itemsize)
        return _tiled_call(x2d, br).reshape(orig_shape)

    # Large ragged inputs: tile the 128-aligned prefix, handle the (<128 elem)
    # remainder with a tiny single-block call instead of padding the tensor.
    n_main = (n // _LANES) * _LANES
    main2d = flat[:n_main].reshape(n_main // _LANES, _LANES)
    br = _pick_block_rows(main2d.shape[0], _LANES, itemsize)
    y_main = _tiled_call(main2d, br).reshape(-1)
    y_tail = _single_block_call(flat[n_main:].reshape(1, n - n_main)).reshape(-1)
    return jnp.concatenate([y_main, y_tail]).reshape(orig_shape)


if __name__ == "__main__":
    key = jax.random.PRNGKey(0)

    # Small NCHW input consistent with the conv-style model this Lambda lives in.
    x = jax.random.normal(key, (2, 4, 16, 16), dtype=jnp.float32)
    y = jax.jit(lambda_forward)(x)
    jax.block_until_ready(y)

    y_ref = x * jax.nn.sigmoid(x)
    assert y.shape == x.shape and y.dtype == x.dtype
    assert jnp.allclose(y, y_ref, atol=1e-5, rtol=1e-5)

    # Also exercise the tiled (gridded) streaming path with a larger activation.
    x_big = jax.random.normal(key, (8, 32, 64, 64), dtype=jnp.float32)  # 4 MiB
    y_big = jax.jit(lambda_forward)(x_big)
    jax.block_until_ready(y_big)
    y_big_ref = x_big * jax.nn.sigmoid(x_big)
    assert y_big.shape == x_big.shape and y_big.dtype == x_big.dtype
    assert jnp.allclose(y_big, y_big_ref, atol=1e-5, rtol=1e-5)

    print("KERNEL_OK")
</pallas_src>

<mosaic_0001>
module attributes {stable_mosaic.version = 11 : i64} {
  func.func @_silu_kernel(%arg0: memref<16x128xf32, #tpu.memory_space<vmem>>, %arg1: memref<16x128xf32, #tpu.memory_space<vmem>>) attributes {dimension_semantics = [], scalar_prefetch = 0 : i64, scratch_operands = 0 : i64, tpu.core_type = #tpu.core_type<tc>} {
    %c0 = arith.constant 0 : index
    %c0_0 = arith.constant 0 : index
    %0 = vector.load %arg0[%c0, %c0_0] : memref<16x128xf32, #tpu.memory_space<vmem>>, vector<16x128xf32>
    %1 = arith.negf %0 : vector<16x128xf32>
    %2 = math.exp %1 : vector<16x128xf32>
    %cst = arith.constant 1.000000e+00 : f32
    %3 = vector.broadcast %cst : f32 to vector<16x128xf32>
    %4 = arith.addf %3, %2 : vector<16x128xf32>
    %5 = arith.divf %3, %4 : vector<16x128xf32>
    %6 = arith.mulf %0, %5 : vector<16x128xf32>
    %c0_1 = arith.constant 0 : index
    %c0_2 = arith.constant 0 : index
    %7 = vector.load %arg1[%c0_1, %c0_2] : memref<16x128xf32, #tpu.memory_space<vmem>>, vector<16x128xf32>
    tpu.vector_store %arg1[%c0_1, %c0_2], %6 {strides = array<i32>} : memref<16x128xf32, #tpu.memory_space<vmem>>, vector<16x128xf32>,
    return
  }
}

</mosaic_0001>

<llo_original>
// kernel: lambda_forward.1
$region0: #{lambda_forward.1}
  #allocation0 [shape = 'u32[]', space=smem, size = 0x4, offset = 0x4, fixed_abs, tag = 'smem constant byte address 0x4 - core index']
  #allocation1 [shape = 'u32[144,128]{1,0:T(1,128)}', space=vmem, size = 0x12000, scoped, tag = 'internal scratch']
  %s0 = inlined_call_operand.vmem [shape: f32[16,128], index: 0, kind: input, shape index: {}]
  %s1 = inlined_call_operand.vmem [shape: f32[16,128], index: 1, kind: output, shape index: {}]
  %s2 = sld [smem:[#allocation0]]
  $region14: #{lambda_forward.1} parent=0
    _
  %s4 = ssub.s32 1, %s2
  %s5 = scalar_select 0, %s4, %s2
  // Predicated region
  $region2: #{lambda_forward.1} parent=0 // pred_check
    _
  $region3: #{lambda_forward.1} parent=0 // pred_check_branch
    %7 = sbr.rel (0) target = $region5
  $region4: #{lambda_forward.1} parent=0 // pred_region
    _
  $region5: #{lambda_forward.1} parent=0 // pred_fallthru
    _
  %v8 = vld [vmem:[%s0] sm:$0xff]
  %v9 = vld [vmem:[%s0 + $0x8] sm:$0xff]
  %v10 = vxor.u32 %v8, 2147483648
  %v11 = vxor.u32 %v9, 2147483648
  %v12 = vmul.f32 %v10, 1.442695
  %v13 = vpow.pop %v12
  %v14 = vmul.f32 %v11, 1.442695
  %v15 = vpow.pop %v14
  %v16 = vadd.f32 %v13, 1.0
  %v17 = vadd.f32 %v15, 1.0
  %v18 = vrcp.pop %v16
  %v19 = vmul.f32 1.0, %v18
  %v20 = vrcp.pop %v17
  %v21 = vmul.f32 1.0, %v20
  %v22 = vmul.f32 %v8, %v19
  %v23 = vmul.f32 %v9, %v21
  %24 = vst [vmem:[%s1] sm:$0xff] %v22
  %25 = vst [vmem:[%s1 + $0x8] sm:$0xff] %v23
  // Predicated region
  $region6: #{lambda_forward.1} parent=0 // pred_check
    _
  $region7: #{lambda_forward.1} parent=0 // pred_check_branch
    %27 = sbr.rel (0) target = $region9
  $region8: #{lambda_forward.1} parent=0 // pred_region
    _
  $region9: #{lambda_forward.1} parent=0 // pred_fallthru
    _
  // Predicated region
  $region10: #{lambda_forward.1} parent=0 // pred_check
    _
  $region11: #{lambda_forward.1} parent=0 // pred_check_branch
    %29 = sbr.rel (0) target = $region13
  $region12: #{lambda_forward.1} parent=0 // pred_region
    _
  $region13: #{lambda_forward.1} parent=0 // pred_fallthru
    _

</llo_original>
